<compile_context>
chip_gen: v7x
topology: tpu7x:2x2x1
jax: 0.10.0
libtpu: 0.0.40
codegen_flags: <defaults>
</compile_context>

<pallas_src>
import functools

import jax
import jax.numpy as jnp
from jax.experimental import pallas as pl
from jax.experimental.pallas import tpu as pltpu

_LANE = 128
_SUBLANE = 8


def _layernorm_kernel(x_ref, w_ref, b_ref, o_ref, *, eps: float):
    # x_ref / o_ref: (bn, C, tile_hw) -- channels on sublanes, spatial on lanes.
    # w_ref / b_ref: (1, C, 1)        -- per-channel affine, broadcast over bn/lanes.
    x = x_ref[...].astype(jnp.float32)
    u = jnp.mean(x, axis=1, keepdims=True)        # per-(n,h,w) mean over C
    d = x - u
    s = jnp.mean(d * d, axis=1, keepdims=True)    # biased variance over C
    inv = jax.lax.rsqrt(s + eps)                  # EUP rsqrt (free slot)
    w = w_ref[...].astype(jnp.float32)
    b = b_ref[...].astype(jnp.float32)
    o_ref[...] = (w * (d * inv) + b).astype(o_ref.dtype)


def _vmem_capacity_bytes() -> int:
    try:
        info = pltpu.get_tpu_info()
        cap = int(getattr(info, "vmem_capacity_bytes", 0))
        if cap > 0:
            return cap
    except Exception:
        pass
    return 64 * 1024 * 1024  # conservative fallback (v7x per-TC VMEM)


def _round_up(x: int, m: int) -> int:
    return ((x + m - 1) // m) * m


def _choose_tiles(N: int, C: int, HW: int, itemsize: int):
    """Pick (bn, tile_hw, vmem_limit_bytes) for blocks of shape (bn, C, tile_hw)."""
    vmem_cap = _vmem_capacity_bytes()

    # Per grid step the pipeline holds 2x(in+out) blocks in the input dtype
    # plus an estimated ~3 full-block f32 intermediates inside the kernel
    # body.  Solve for the block-byte budget so everything fits in ~72% of
    # physical VMEM (v7x ~6-7 MiB f32 blocks, v5e/v6e ~12-13 MiB).
    budget = int(vmem_cap * 0.72)
    target = int(budget / (4.0 + 12.0 / itemsize))
    target = max(2 * 1024 * 1024, min(16 * 1024 * 1024, target))

    c_pad = _round_up(C, _SUBLANE)
    hw_pad = _round_up(HW, _LANE)
    bytes_per_n = c_pad * hw_pad * itemsize  # one batch element's VMEM footprint

    if bytes_per_n >= target:
        # Large-HW regime: one batch element per step, lane-dense HW tiles.
        bn = 1
        tile_hw = max(_LANE, (target // (itemsize * c_pad)) // _LANE * _LANE)
        tile_hw = min(tile_hw, hw_pad)
    else:
        # Small-HW regime (late stages): pack several batch elems per step.
        bn = max(1, min(N, target // max(1, bytes_per_n)))
        tile_hw = HW

    # Ensure enough grid steps for megacore sharding + DMA/compute overlap.
    total_bytes = N * C * HW * itemsize
    min_steps = 8 if total_bytes >= 4 * target else 4
    while pl.cdiv(N, bn) * pl.cdiv(HW, tile_hw) < min_steps:
        if bn > 1:
            bn = max(1, bn // 2)
        elif tile_hw > _LANE:
            new_hw = max(_LANE, (tile_hw // 2) // _LANE * _LANE)
            if new_hw == tile_hw:
                break
            tile_hw = new_hw
        else:
            break

    # VMEM limit from actual estimated usage (+ slack), clamped to capacity.
    lanes = _round_up(tile_hw, _LANE)
    elems = bn * c_pad * lanes
    io_bytes = 4 * elems * itemsize          # double-buffered in + out blocks
    tmp_bytes = 3 * elems * 4                # in-kernel f32 intermediates (est.)
    wb_bytes = 2 * c_pad * _LANE * 4         # resident weight + bias (padded)
    need = io_bytes + tmp_bytes + wb_bytes + 4 * 1024 * 1024
    vmem_limit = int(min(max(need, 32 * 1024 * 1024), vmem_cap))

    return int(bn), int(tile_hw), vmem_limit


def layernorm_nchw(x, weight, bias, eps: float = 1e-6):
    """x: (N, C, H, W); weight, bias: (C,). Returns (N, C, H, W)."""
    N, C, H, W = x.shape
    HW = H * W

    # Free views on contiguous NCHW -- no transpose traffic through HBM.
    x3 = x.reshape(N, C, HW)
    w3 = weight.reshape(1, C, 1)
    b3 = bias.reshape(1, C, 1)

    itemsize = jnp.dtype(x.dtype).itemsize
    bn, tile_hw, vmem_limit = _choose_tiles(N, C, HW, itemsize)
    grid = (pl.cdiv(N, bn), pl.cdiv(HW, tile_hw))

    out3 = pl.pallas_call(
        functools.partial(_layernorm_kernel, eps=eps),
        out_shape=jax.ShapeDtypeStruct((N, C, HW), x.dtype),
        grid_spec=pltpu.PrefetchScalarGridSpec(
            num_scalar_prefetch=0,
            grid=grid,
            in_specs=[
                # (bn batch elems, full C on sublanes, lane tile of HW).
                pl.BlockSpec((bn, C, tile_hw), lambda n, j: (n, 0, j)),
                # weight/bias: whole array resident in VMEM, no per-step DMA.
                pl.BlockSpec(memory_space=pltpu.MemorySpace.VMEM),
                pl.BlockSpec(memory_space=pltpu.MemorySpace.VMEM),
            ],
            out_specs=pl.BlockSpec((bn, C, tile_hw), lambda n, j: (n, 0, j)),
        ),
        compiler_params=pltpu.CompilerParams(
            dimension_semantics=("parallel", "parallel"),
            vmem_limit_bytes=vmem_limit,
        ),
    )(x3, w3, b3)

    return out3.reshape(N, C, H, W)


def layernorm_ref(x, weight, bias, eps=1e-6):
    """Pure-JAX reference matching the PyTorch forward exactly."""
    u = jnp.mean(x, axis=1, keepdims=True)
    s = jnp.mean((x - u) ** 2, axis=1, keepdims=True)
    xn = (x - u) / jnp.sqrt(s + eps)
    return weight[None, :, None, None] * xn + bias[None, :, None, None]


if __name__ == "__main__":
    key = jax.random.PRNGKey(0)

    cases = [
        (2, 4, 16, 16),  # primary shape: lane-dense tiles, even division
        (3, 6, 7, 7),    # small-HW (late-stage) regime: HW < 128, masked lanes
        (1, 4, 12, 12),  # ragged last HW tile after the min-step shrink
    ]
    for idx, (N, C, H, W) in enumerate(cases):
        k1, k2, k3, key = jax.random.split(key, 4)
        x = jax.random.normal(k1, (N, C, H, W), dtype=jnp.float32)
        # Module __init__ uses ones/zeros; perturb slightly so the affine
        # path is genuinely exercised.
        weight = jnp.ones((C,), jnp.float32) + 0.1 * jax.random.normal(k2, (C,), jnp.float32)
        bias = jnp.zeros((C,), jnp.float32) + 0.1 * jax.random.normal(k3, (C,), jnp.float32)

        out = jax.block_until_ready(layernorm_nchw(x, weight, bias, eps=1e-6))
        ref = layernorm_ref(x, weight, bias, eps=1e-6)
        assert out.shape == (N, C, H, W)
        assert jnp.allclose(out, ref, atol=1e-5, rtol=1e-5), f"mismatch vs reference (case {idx})"

    print("KERNEL_OK")
</pallas_src>

<mosaic_0001>
module attributes {stable_mosaic.version = 11 : i64} {
  func.func @_layernorm_kernel(%arg0: i32, %arg1: i32, %arg2: memref<1x4x128xf32, #tpu.memory_space<vmem>>, %arg3: memref<1x4x1xf32, #tpu.memory_space<vmem>>, %arg4: memref<1x4x1xf32, #tpu.memory_space<vmem>>, %arg5: memref<1x4x128xf32, #tpu.memory_space<vmem>>) attributes {dimension_semantics = [#tpu.dimension_semantics<parallel>, #tpu.dimension_semantics<parallel>], iteration_bounds = array<i64: 2, 2>, scalar_prefetch = 0 : i64, scratch_operands = 0 : i64, tpu.core_type = #tpu.core_type<tc>, window_params = [{transform_indices = @transform_0, window_bounds = array<i64: 1, 4, 128>}, {pipeline_mode = #tpu.pipeline_mode<synchronous>, transform_indices = @transform_1, window_bounds = array<i64: 1, 4, 1>}, {pipeline_mode = #tpu.pipeline_mode<synchronous>, transform_indices = @transform_2, window_bounds = array<i64: 1, 4, 1>}, {transform_indices = @transform_3, window_bounds = array<i64: 1, 4, 128>}]} {
    %c0 = arith.constant 0 : index
    %c0_0 = arith.constant 0 : index
    %c0_1 = arith.constant 0 : index
    %0 = vector.load %arg2[%c0, %c0_0, %c0_1] : memref<1x4x128xf32, #tpu.memory_space<vmem>>, vector<1x4x128xf32>
    %cst = arith.constant dense<0.000000e+00> : vector<1x128xf32>
    %1 = vector.multi_reduction <add>, %0, %cst [1] : vector<1x4x128xf32> to vector<1x128xf32>
    %2 = vector.shape_cast %1 : vector<1x128xf32> to vector<1x1x128xf32>
    %cst_2 = arith.constant 4.000000e+00 : f32
    %3 = vector.broadcast %cst_2 : f32 to vector<1x1x128xf32>
    %4 = arith.divf %2, %3 : vector<1x1x128xf32>
    %5 = vector.broadcast %4 : vector<1x1x128xf32> to vector<1x4x128xf32>
    %6 = arith.subf %0, %5 : vector<1x4x128xf32>
    %7 = arith.mulf %6, %6 : vector<1x4x128xf32>
    %cst_3 = arith.constant dense<0.000000e+00> : vector<1x128xf32>
    %8 = vector.multi_reduction <add>, %7, %cst_3 [1] : vector<1x4x128xf32> to vector<1x128xf32>
    %9 = vector.shape_cast %8 : vector<1x128xf32> to vector<1x1x128xf32>
    %cst_4 = arith.constant 4.000000e+00 : f32
    %10 = vector.broadcast %cst_4 : f32 to vector<1x1x128xf32>
    %11 = arith.divf %9, %10 : vector<1x1x128xf32>
    %cst_5 = arith.constant 9.99999997E-7 : f32
    %12 = vector.broadcast %cst_5 : f32 to vector<1x1x128xf32>
    %13 = arith.addf %11, %12 : vector<1x1x128xf32>
    %14 = math.rsqrt %13 : vector<1x1x128xf32>
    %c0_6 = arith.constant 0 : index
    %c0_7 = arith.constant 0 : index
    %c0_8 = arith.constant 0 : index
    %15 = vector.load %arg3[%c0_6, %c0_7, %c0_8] : memref<1x4x1xf32, #tpu.memory_space<vmem>>, vector<1x4x1xf32>
    %c0_9 = arith.constant 0 : index
    %c0_10 = arith.constant 0 : index
    %c0_11 = arith.constant 0 : index
    %16 = vector.load %arg4[%c0_9, %c0_10, %c0_11] : memref<1x4x1xf32, #tpu.memory_space<vmem>>, vector<1x4x1xf32>
    %17 = vector.broadcast %14 : vector<1x1x128xf32> to vector<1x4x128xf32>
    %18 = arith.mulf %6, %17 : vector<1x4x128xf32>
    %19 = vector.broadcast %15 : vector<1x4x1xf32> to vector<1x4x128xf32>
    %20 = arith.mulf %19, %18 : vector<1x4x128xf32>
    %21 = vector.broadcast %16 : vector<1x4x1xf32> to vector<1x4x128xf32>
    %22 = arith.addf %20, %21 : vector<1x4x128xf32>
    %c0_12 = arith.constant 0 : index
    %c0_13 = arith.constant 0 : index
    %c0_14 = arith.constant 0 : index
    %23 = vector.load %arg5[%c0_12, %c0_13, %c0_14] : memref<1x4x128xf32, #tpu.memory_space<vmem>>, vector<1x4x128xf32>
    tpu.vector_store %arg5[%c0_12, %c0_13, %c0_14], %22 {strides = array<i32>} : memref<1x4x128xf32, #tpu.memory_space<vmem>>, vector<1x4x128xf32>,
    return
  }
  func.func @transform_0(%arg0: i32, %arg1: i32) -> (i32, i32, i32) {
    %c0_i32 = arith.constant 0 : i32
    %c0_i32_0 = arith.constant 0 : i32
    return %arg0, %c0_i32, %arg1 : i32, i32, i32
  }
  func.func @transform_1(%arg0: i32, %arg1: i32) -> (i32, i32, i32) {
    %c0_i32 = arith.constant 0 : i32
    %c0_i32_0 = arith.constant 0 : i32
    %c0_i32_1 = arith.constant 0 : i32
    %c0_i32_2 = arith.constant 0 : i32
    return %c0_i32, %c0_i32_0, %c0_i32_1 : i32, i32, i32
  }
  func.func @transform_2(%arg0: i32, %arg1: i32) -> (i32, i32, i32) {
    %c0_i32 = arith.constant 0 : i32
    %c0_i32_0 = arith.constant 0 : i32
    %c0_i32_1 = arith.constant 0 : i32
    %c0_i32_2 = arith.constant 0 : i32
    return %c0_i32, %c0_i32_0, %c0_i32_1 : i32, i32, i32
  }
  func.func @transform_3(%arg0: i32, %arg1: i32) -> (i32, i32, i32) {
    %c0_i32 = arith.constant 0 : i32
    %c0_i32_0 = arith.constant 0 : i32
    return %arg0, %c0_i32, %arg1 : i32, i32, i32
  }
}

</mosaic_0001>

<llo_original>
// kernel: tpu_custom_call.1
$region0: #{tpu_custom_call.1}
  #allocation0 [shape = 'u32[]', space=smem, size = 0x4, offset = 0x4, fixed_abs, tag = 'smem constant byte address 0x4 - core index']
  #allocation1 [shape = 'u32[144,128]{1,0:T(1,128)}', space=vmem, size = 0x12000, scoped, tag = 'internal scratch']
  %s0 = inlined_call_operand.hbm [shape: f32[2,4,256], index: 0, kind: input, shape index: {}]
  %s1 = inlined_call_operand.vmem [shape: f32[1,4,1], index: 1, kind: input, shape index: {}]
  %s2 = inlined_call_operand.vmem [shape: f32[1,4,1], index: 2, kind: input, shape index: {}]
  %s3 = inlined_call_operand.hbm [shape: f32[2,4,256], index: 3, kind: output, shape index: {}]
  %s4 = sld [smem:[#allocation0]]
  $region49: #{tpu_custom_call.1} parent=0
    _
  %s6 = ssub.s32 1, %s4
  %s7 = scalar_select 0, %s6, %s4
  $region1: #{tpu_custom_call.1} parent=0
    #allocation2 [shape = 'u8[4096]{0}', space=vmem, size = 0x1000, scoped, tag = 'input window, operand 0']
    #allocation3 [shape = 's32[2]{0}', space=sflag, size = 0x8, scoped, tag = 'scoped memory for tpu_custom_call.1']
    #allocation4 [shape = 's32[2]{0}', space=sflag, size = 0x8, scoped, tag = 'scoped memory for tpu_custom_call.1']
    #allocation5 [shape = 'u8[4096]{0}', space=vmem, size = 0x1000, scoped, tag = 'output window, operand 0']
    %8 = vsyncpa [#allocation3], 0
    %s9 = scalar_lea.sflag [#allocation3], 1
    %10 = vsyncpa %s9, 0
    %11 = vsyncpa [#allocation4], 0
    %s12 = scalar_lea.sflag [#allocation4], 1
    %13 = vsyncpa %s12, 0
    loop: start=0, step=1, limit=6
    $region2: #{tpu_custom_call.1} parent=1 // loop_pre_header
      _
    $region3: #{tpu_custom_call.1} parent=1 // loop_header
      %s15 = sphi 0, %s19
      %p16 = scmp.ge.s32.totalorder %s15, 6
      %s22 = sphi 0, %s34
      %s23 = sphi 0, %s30
      %s24 = sphi 0, %s22
      %s25 = sphi 0, %s23
      %s26 = sphi 0, %s24
      %s27 = sphi 0, %s25
      %s39 = sphi 0, %s41
      %s42 = sphi 0, %s39
      %s43 = sphi 0, %s42
      %s59 = sphi 0, %s43
      %s63 = sphi 0, %s63
      %s65 = sphi 0, %s63
      %s66 = sphi 0, %s65
      %s80 = sphi 0, %s66
      %s84 = sphi 0, %s84
      %s86 = sphi 0, %s84
      %s87 = sphi 0, %s86
      %s101 = sphi 0, %s87
      %s109 = sphi 0, %s111
      %s112 = sphi 0, %s109
      %s113 = sphi 0, %s112
      %s129 = sphi 0, %s113
    $region4: #{tpu_custom_call.1} parent=1 // loop_header_branch
      %18 = sbr.rel (%p16) target = $region8
    $region5: #{tpu_custom_call.1} parent=1 // loop_body
      %s20 = ssub.s32 %s15, 1
      %s21 = ssub.s32 %s15, 2
      %s28 = sadd.s32 1, %s23
      %p29 = scmp.ge.s32.totalorder %s28, 2
      %s30 = scalar_select %p29, 0, %s28
      %s31 = sadd.s32 1, %s22
      %s32 = scalar_select %p29, %s31, %s22
      %p33 = scmp.ge.s32.totalorder %s32, 2
      %s34 = scalar_select %p33, 0, %s32
      %s35 = ssub.s32 %s22, %s34
      %s36 = ssub.s32 %s23, %s30
      %s37 = sor.u32 %s35, %s36
      %p38 = scmp.eq.s32.totalorder %s37, 0
      %s40 = sadd.s32 %s39, 1
      %s41 = scalar_select %p38, %s39, %s40
      %p44 = pneg %p38
      %p45 = scmp.eq.s32.totalorder %s15, 3
      %p46 = por %p44, %p45
      %p47 = scmp.ne.s32.totalorder %s39, %s42
      %p48 = scmp.eq.s32.totalorder %s15, 0
      %p49 = por %p47, %p48
      %p50 = scmp.ne.s32.totalorder %s39, %s42
      %p51 = scmp.eq.s32.totalorder %s20, 3
      %p52 = por %p50, %p51
      %p53 = scmp.ne.s32.totalorder %s42, %s43
      %p54 = scmp.eq.s32.totalorder %s20, 0
      %p55 = por %p53, %p54
      %p56 = scmp.ne.s32.totalorder %s42, %s43
      %p57 = scmp.eq.s32.totalorder %s21, 3
      %p58 = por %p56, %p57
      %p60 = scmp.ne.s32.totalorder %s43, %s59
      %p61 = scmp.eq.s32.totalorder %s21, 0
      %p62 = por %p60, %p61
      %s64 = sadd.s32 %s63, 1
      %p67 = scmp.eq.s32.totalorder %s15, 3
      %p68 = scmp.ne.s32.totalorder %s63, %s65
      %p69 = scmp.eq.s32.totalorder %s15, 0
      %p70 = por %p68, %p69
      %p71 = scmp.ne.s32.totalorder %s63, %s65
      %p72 = scmp.eq.s32.totalorder %s20, 3
      %p73 = por %p71, %p72
      %p74 = scmp.ne.s32.totalorder %s65, %s66
      %p75 = scmp.eq.s32.totalorder %s20, 0
      %p76 = por %p74, %p75
      %p77 = scmp.ne.s32.totalorder %s65, %s66
      %p78 = scmp.eq.s32.totalorder %s21, 3
      %p79 = por %p77, %p78
      %p81 = scmp.ne.s32.totalorder %s66, %s80
      %p82 = scmp.eq.s32.totalorder %s21, 0
      %p83 = por %p81, %p82
      %s85 = sadd.s32 %s84, 1
      %p88 = scmp.eq.s32.totalorder %s15, 3
      %p89 = scmp.ne.s32.totalorder %s84, %s86
      %p90 = scmp.eq.s32.totalorder %s15, 0
      %p91 = por %p89, %p90
      %p92 = scmp.ne.s32.totalorder %s84, %s86
      %p93 = scmp.eq.s32.totalorder %s20, 3
      %p94 = por %p92, %p93
      %p95 = scmp.ne.s32.totalorder %s86, %s87
      %p96 = scmp.eq.s32.totalorder %s20, 0
      %p97 = por %p95, %p96
      %p98 = scmp.ne.s32.totalorder %s86, %s87
      %p99 = scmp.eq.s32.totalorder %s21, 3
      %p100 = por %p98, %p99
      %p102 = scmp.ne.s32.totalorder %s87, %s101
      %p103 = scmp.eq.s32.totalorder %s21, 0
      %p104 = por %p102, %p103
      %s105 = ssub.s32 %s22, %s34
      %s106 = ssub.s32 %s23, %s30
      %s107 = sor.u32 %s105, %s106
      %p108 = scmp.eq.s32.totalorder %s107, 0
      %s110 = sadd.s32 %s109, 1
      %s111 = scalar_select %p108, %s109, %s110
      %p114 = pneg %p108
      %p115 = scmp.eq.s32.totalorder %s15, 3
      %p116 = por %p114, %p115
      %p117 = scmp.ne.s32.totalorder %s109, %s112
      %p118 = scmp.eq.s32.totalorder %s15, 0
      %p119 = por %p117, %p118
      %p120 = scmp.ne.s32.totalorder %s109, %s112
      %p121 = scmp.eq.s32.totalorder %s20, 3
      %p122 = por %p120, %p121
      %p123 = scmp.ne.s32.totalorder %s112, %s113
      %p124 = scmp.eq.s32.totalorder %s20, 0
      %p125 = por %p123, %p124
      %p126 = scmp.ne.s32.totalorder %s112, %s113
      %p127 = scmp.eq.s32.totalorder %s21, 3
      %p128 = por %p126, %p127
      %p130 = scmp.ne.s32.totalorder %s113, %s129
      %p131 = scmp.eq.s32.totalorder %s21, 0
      %p132 = por %p130, %p131
      %p133 = scmp.le.s32.totalorder 1, %s15
      %p134 = scmp.lt.s32.totalorder %s15, 5
      %p135 = pnand %p133, %p134
      %p136 = pneg %p135
      // Predicated region
      $region9: #{tpu_custom_call.1} parent=5 // pred_check
        _
      $region10: #{tpu_custom_call.1} parent=5 // pred_check_branch
        %138 = sbr.rel (%p135) target = $region12
      $region11: #{tpu_custom_call.1} parent=5 // pred_region
        %s139 = ssub.s32 %s15, 1
        // Predicated region
        $region13: #{tpu_custom_call.1} parent=11 // pred_check
          %p140 = pneg %p76
        $region14: #{tpu_custom_call.1} parent=11 // pred_check_branch
          %142 = sbr.rel (%p140) target = $region16
        $region15: #{tpu_custom_call.1} parent=11 // pred_region
          _
        $region16: #{tpu_custom_call.1} parent=11 // pred_fallthru
          _
        // Predicated region
        $region17: #{tpu_custom_call.1} parent=11 // pred_check
          %p143 = pneg %p97
        $region18: #{tpu_custom_call.1} parent=11 // pred_check_branch
          %145 = sbr.rel (%p143) target = $region20
        $region19: #{tpu_custom_call.1} parent=11 // pred_region
          _
        $region20: #{tpu_custom_call.1} parent=11 // pred_fallthru
          _
      $region12: #{tpu_custom_call.1} parent=5 // pred_fallthru
        _
      %p146 = scmp.lt.s32.totalorder %s15, 4
      // Predicated region
      $region21: #{tpu_custom_call.1} parent=5 // pred_check
        %p147 = pneg %p146
      $region22: #{tpu_custom_call.1} parent=5 // pred_check_branch
        %149 = sbr.rel (%p147) target = $region24
      $region23: #{tpu_custom_call.1} parent=5 // pred_region
        // Predicated region
        $region25: #{tpu_custom_call.1} parent=23 // pred_check
          %p150 = pneg %p49
        $region26: #{tpu_custom_call.1} parent=23 // pred_check_branch
          %152 = sbr.rel (%p150) target = $region28
        $region27: #{tpu_custom_call.1} parent=23 // pred_region
          %s153 = sand.u32 %s39, 1
          %s154 = scalar_lea.sflag [#allocation3], %s153
          %s155 = sand.u32 %s39, 1
          %s156 = smul.addr %s155, 4
          %s157 = scalar_lea.vmem [#allocation2], %s156
          %s159 = ssub.s32 64, 64
          %160 = vsyncadd %s154, %s159
          %s161 = smul.addr %s22, 2
          %s162 = sadd.s32 %s23, %s161
          %s163 = smul.addr %s162, 64
          %s164 = scalar_lea.hbm %s0, %s163
          %s166 = sshll.u32 %s157, 4
          %s167 = int_to_ptr.vmem [resolvable:$true] %s166
          %169 = dma.hbm_to_vmem [thread:$0]  %s164, 64, %s167, %s154
        $region28: #{tpu_custom_call.1} parent=23 // pred_fallthru
          _
      $region24: #{tpu_custom_call.1} parent=5 // pred_fallthru
        _
      %p170 = scmp.le.s32.totalorder 1, %s15
      %p171 = scmp.lt.s32.totalorder %s15, 5
      %p172 = pnand %p170, %p171
      %p173 = pneg %p172
      // Predicated region
      $region29: #{tpu_custom_call.1} parent=5 // pred_check
        _
      $region30: #{tpu_custom_call.1} parent=5 // pred_check_branch
        %175 = sbr.rel (%p172) target = $region32
      $region31: #{tpu_custom_call.1} parent=5 // pred_region
        %s176 = ssub.s32 %s15, 1
        %s177 = sand.u32 %s42, 1
        %s178 = scalar_lea.sflag [#allocation3], %s177
        %s179 = sand.u32 %s42, 1
        %s180 = smul.addr %s179, 4
        %s181 = scalar_lea.vmem [#allocation2], %s180
        // Predicated region
        $region33: #{tpu_custom_call.1} parent=31 // pred_check
          %p182 = pneg %p55
        $region34: #{tpu_custom_call.1} parent=31 // pred_check_branch
          %184 = sbr.rel (%p182) target = $region36
        $region35: #{tpu_custom_call.1} parent=31 // pred_region
          %185 = dma.done %s178, 64
        $region36: #{tpu_custom_call.1} parent=31 // pred_fallthru
          _
        %s186 = sand.u32 %s42, 1
        %s187 = scalar_lea.sflag [#allocation3], %s186
        %s188 = sand.u32 %s42, 1
        %s189 = smul.addr %s188, 4
        %s190 = scalar_lea.vmem [#allocation2], %s189
        %p191 = pneg %p55
        %p192 = pneg %p52
        %p193 = pneg %p76
        %p194 = pneg %p73
        %p195 = pneg %p97
        %p196 = pneg %p94
        %p197 = pneg %p125
        %p198 = pneg %p122
        %s199 = sand.u32 %s112, 1
        %s200 = scalar_lea.sflag [#allocation4], %s199
        %s201 = sand.u32 %s112, 1
        %s202 = smul.addr %s201, 4
        %s203 = scalar_lea.vmem [#allocation5], %s202
        %v204 = vld [vmem:[%s181] sm:$0xf]
        %vm205 = vcmask 1043456
        %v206 = vsel %vm205, %v204, 0.0
        %v207 = vrot.slane %v206, 4
        %v208 = vadd.f32 %v206, %v207
        %v209 = vrot.slane %v208, 2
        %v210 = vadd.f32 %v208, %v209
        %v211 = vrot.slane %v210, 1
        %v212 = vadd.f32 %v210, %v211
        %v213 = vrcp.pop 4.0
        %v214 = vmul.f32 %v212, %v213
        %v215 = vsub.f32 %v204, %v214
        %v216 = vmul.f32 %v215, %v215
        %v217 = vsel %vm205, %v216, 0.0
        %v218 = vrot.slane %v217, 4
        %v219 = vadd.f32 %v217, %v218
        %v220 = vrot.slane %v219, 2
        %v221 = vadd.f32 %v219, %v220
        %v222 = vrot.slane %v221, 1
        %v223 = vadd.f32 %v221, %v222
        %v224 = vmul.f32 %v223, %v213
        %v225 = vadd.f32 %v224, 1e-06
        %v226 = vrsqrt.pop %v225
        %v227 = vld [vmem:[%s1] sm:$0xf]
        %v228 = vld [vmem:[%s2] sm:$0xf]
        %v229 = vmul.f32 %v215, %v226
        %231 = vset.pattern.permute.xlu0 0
        %232 = vperm.xlu0 %231, %v227
        %v233 = vpop.permute.xlu0 %232
        %v235 = vmul.f32 %v233, %v229
        %237 = vset.pattern.permute.xlu0 0
        %238 = vperm.xlu0 %237, %v228
        %v239 = vpop.permute.xlu0 %238
        %v241 = vadd.f32 %v235, %v239
        %242 = vst [vmem:[%s203] sm:$0xf] %v241
        %s243 = sand.u32 %s112, 1
        %s244 = scalar_lea.sflag [#allocation4], %s243
        %s245 = sand.u32 %s112, 1
        %s246 = smul.addr %s245, 4
        %s247 = scalar_lea.vmem [#allocation5], %s246
        // Predicated region
        $region37: #{tpu_custom_call.1} parent=31 // pred_check
          %p248 = pneg %p122
        $region38: #{tpu_custom_call.1} parent=31 // pred_check_branch
          %250 = sbr.rel (%p248) target = $region40
        $region39: #{tpu_custom_call.1} parent=31 // pred_region
          %s252 = ssub.s32 64, 64
          %253 = vsyncadd %s244, %s252
          %s254 = smul.addr %s24, 2
          %s255 = sadd.s32 %s25, %s254
          %s256 = smul.addr %s255, 64
          %s257 = scalar_lea.hbm %s3, %s256
          %s259 = sshll.u32 %s247, 4
          %s260 = int_to_ptr.vmem [resolvable:$true] %s259
          %262 = dma.vmem_to_hbm [thread:$0]  %s260, 64, %s257, %s244
        $region40: #{tpu_custom_call.1} parent=31 // pred_fallthru
          _
      $region32: #{tpu_custom_call.1} parent=5 // pred_fallthru
        _
      %p263 = scmp.le.s32.totalorder 2, %s15
      // Predicated region
      $region41: #{tpu_custom_call.1} parent=5 // pred_check
        %p264 = pneg %p263
      $region42: #{tpu_custom_call.1} parent=5 // pred_check_branch
        %266 = sbr.rel (%p264) target = $region44
      $region43: #{tpu_custom_call.1} parent=5 // pred_region
        %s267 = ssub.s32 %s15, 2
        // Predicated region
        $region45: #{tpu_custom_call.1} parent=43 // pred_check
          %p268 = pneg %p128
        $region46: #{tpu_custom_call.1} parent=43 // pred_check_branch
          %270 = sbr.rel (%p268) target = $region48
        $region47: #{tpu_custom_call.1} parent=43 // pred_region
          %s271 = sand.u32 %s113, 1
          %s272 = scalar_lea.sflag [#allocation4], %s271
          %s273 = sand.u32 %s113, 1
          %s274 = smul.addr %s273, 4
          %s275 = scalar_lea.vmem [#allocation5], %s274
          %276 = dma.done %s272, 64
        $region48: #{tpu_custom_call.1} parent=43 // pred_fallthru
          _
      $region44: #{tpu_custom_call.1} parent=5 // pred_fallthru
        _
    $region6: #{tpu_custom_call.1} parent=1 // loop_footer
      %s19 = sadd.s32 1, %s15
    $region7: #{tpu_custom_call.1} parent=1 // loop_footer_branch
      %14 = sbr.rel target = $region3
    $region8: #{tpu_custom_call.1} parent=1 // loop_exit
      _
    %277 = vsyncpa [#allocation3], 1
    %s278 = scalar_lea.sflag [#allocation3], 1
    %279 = vsyncpa %s278, 1
    %280 = vsyncpa [#allocation4], 1
    %s281 = scalar_lea.sflag [#allocation4], 1
    %282 = vsyncpa %s281, 1

</llo_original>
